<compile_context>
chip_gen: v6e
topology: v6e:2x2x1
jax: 0.10.0
libtpu: 0.0.40
codegen_flags: <defaults>
</compile_context>

<pallas_src>
import jax
import jax.numpy as jnp
from jax import lax
from jax.experimental import pallas as pl
from jax.experimental.pallas import tpu as pltpu


def _round_up(v, m):
    return ((v + m - 1) // m) * m


def _vmem_budgets():
    """(input-tile budget, scoped vmem limit) sized per TPU generation."""
    try:
        info = pltpu.get_tpu_info()
        cap = int(getattr(info, "vmem_capacity_bytes", 64 * 1024 * 1024))
    except Exception:
        cap = 64 * 1024 * 1024          # conservative fallback (v7x-sized)
    if cap >= 100 * 1024 * 1024:        # v5e / v6e: 128 MiB VMEM
        return 48 * 1024 * 1024, 96 * 1024 * 1024
    return 16 * 1024 * 1024, 32 * 1024 * 1024   # v7x: 64 MiB per TensorCore


def _pick_packs_per_step(KM, E, sub, x_itemsize, s_itemsize, budget_bytes, P):
    """Packs-per-grid-step Pb from padded VMEM footprints (conservative)."""
    km8 = _round_up(KM, 8)
    km128 = _round_up(KM, 128)
    e128 = _round_up(E, 128)
    per_pack_in = km8 * e128 * x_itemsize + km128 * s_itemsize      # one pack of x + status
    # Inner-loop live set: f32 copy of the SUB-pack x slice + ~6 (SUB,KM,KM) f32
    # temporaries (gram / d2 / joint / jm / scaled / ...), plus the block-diag mask.
    temporaries = sub * (km8 * e128 * 4 + 6 * km8 * km128 * 4) + km8 * km128 * 4
    avail = max(budget_bytes - temporaries, 2 * per_pack_in)
    pb = max(sub, (avail // (2 * per_pack_in)) // sub * sub)        # 2x: double-buffered inputs
    pb = min(pb, _round_up(P, sub))                                 # never exceed the work
    if P >= 2 * sub:
        # Keep at least two chunks so v7x can shard them across its two TensorCores.
        pb = min(pb, max(sub, _round_up(-(-P // 2), sub)))
    return pb


def _make_kernel(sub, gram_dtype, with_mask):
    """Kernel over one chunk of Pb packs; each pack holds K groups of M points."""

    def kernel(*refs):
        if with_mask:
            mask_ref, x_ref, s_ref, o_ref = refs
        else:
            x_ref, s_ref, o_ref = refs
            mask_ref = None

        Pb, KM, E = x_ref.shape
        n_inner = Pb // sub
        mask = mask_ref[...] if mask_ref is not None else None      # (KM, KM), loaded once

        def body(t, best):
            i = pl.multiple_of(t * sub, sub)
            x = x_ref[pl.ds(i, sub)].astype(jnp.float32)            # (sub, KM, E)
            s = s_ref[pl.ds(i, sub)].astype(jnp.float32)            # (sub, KM)

            # Pairwise squared distances inside each pack via one lane-dense Gram (MXU).
            sq_col = jnp.sum(x * x, axis=-1, keepdims=True)         # (sub, KM, 1)
            sq_row = jnp.swapaxes(sq_col, -1, -2)                   # (sub, 1, KM)
            xg = x.astype(gram_dtype)
            gram = jnp.einsum("pme,pne->pmn", xg, xg,
                              preferred_element_type=jnp.float32)   # (sub, KM, KM)
            d2 = jnp.maximum(sq_col + sq_row - 2.0 * gram, 0.0)

            # relu(s_i * s_j), restricted to within-group pairs, then squared.
            s_row = s[:, None, :]                                   # (sub, 1, KM)
            s_col = jnp.swapaxes(s_row, -1, -2)                     # (sub, KM, 1)
            jm = jnp.maximum(s_col * s_row, 0.0)                    # (sub, KM, KM)
            if mask is not None:
                jm = jm * mask                                      # zero cross-group pairs
            scaled = d2 * (jm * jm)                                 # (dist * relu(joint))^2
            return jnp.maximum(best, jnp.max(scaled))

        best = lax.fori_loop(0, n_inner, body,
                             jnp.zeros((1, 1), jnp.float32),
                             unroll=(n_inner <= 2))
        o_ref[...] = jnp.broadcast_to(jnp.max(best), o_ref.shape)

    return kernel


def max_match_loss(x, status, *, sigma, matches_loss_weight, gram_dtype=jnp.float32):
    """Pallas implementation of MaxMatchLoss.forward (returned loss value only)."""
    N, NM, M, E = x.shape
    assert status.shape == (N, NM, M)
    G = N * NM
    assert G >= 1 and M >= 1

    # Pack K groups per 128-sublane slab so the Gram matmul and all (KM, KM)
    # temporaries are lane-dense.
    K = max(1, 128 // M)
    KM = K * M
    P = -(-G // K)                       # packs needed to hold all G groups

    budget, vmem_limit = _vmem_budgets()
    sub = min(8, P)                      # packs per inner fori_loop step
    Pb = _pick_packs_per_step(KM, E, sub, x.dtype.itemsize, status.dtype.itemsize,
                              budget, P)
    n_chunks = -(-P // Pb)
    P_pad = n_chunks * Pb
    G_pad = P_pad * K

    # Flatten to (G, M, E) / (G, M), zero-pad to G_pad, and pack.  Zero padding is
    # exact: padded groups contribute 0 and every real group's diagonal already
    # contributes 0, so the global max is unchanged.
    x_flat = x.reshape(G, M, E)          # keep native dtype in HBM; cast inside kernel
    s_flat = status.reshape(G, M)
    if G_pad != G:
        x_flat = jnp.pad(x_flat, ((0, G_pad - G), (0, 0), (0, 0)))
        s_flat = jnp.pad(s_flat, ((0, G_pad - G), (0, 0)))
    x_packed = x_flat.reshape(P_pad, KM, E)
    s_packed = s_flat.reshape(P_pad, KM)

    # Block-diagonal mask (1 within a group's MxM block, 0 across groups) built once
    # on the host side; its block index is constant so Pallas DMAs it only once.
    mask_inputs = ()
    mask_specs = []
    if K > 1:
        gid = jnp.arange(KM, dtype=jnp.int32) // M
        blk_mask = (gid[:, None] == gid[None, :]).astype(jnp.float32)   # (KM, KM)
        mask_inputs = (blk_mask,)
        mask_specs = [pl.BlockSpec((KM, KM), lambda c: (0, 0))]

    kernel = _make_kernel(sub, gram_dtype, with_mask=(K > 1))

    partial = pl.pallas_call(
        kernel,
        out_shape=jax.ShapeDtypeStruct((n_chunks, 1, 1), jnp.float32),
        grid_spec=pltpu.PrefetchScalarGridSpec(
            num_scalar_prefetch=0,
            grid=(n_chunks,),
            in_specs=mask_specs + [
                pl.BlockSpec((Pb, KM, E), lambda c: (c, 0, 0)),
                pl.BlockSpec((Pb, KM), lambda c: (c, 0)),
            ],
            out_specs=pl.BlockSpec((1, 1, 1), lambda c: (c, 0, 0)),
        ),
        compiler_params=pltpu.CompilerParams(
            dimension_semantics=("parallel",),     # disjoint per-chunk partial maxima
            vmem_limit_bytes=vmem_limit,
        ),
    )(*mask_inputs, x_packed, s_packed)

    # Scalar epilogue in plain JAX: one max, one sqrt, one exp.
    m_max = jnp.max(partial)                       # max_{g,i,j} (dist_ij * relu(joint_ij))^2
    dist_max = jnp.sqrt(m_max)
    loss = 1.0 - jnp.exp(-dist_max / (2.0 * float(sigma) ** 2))
    return matches_loss_weight * loss


def _reference_loss(x, status, *, sigma, matches_loss_weight):
    """Pure-JAX transcription of the PyTorch forward (loss branch only)."""
    joint = status[:, :, None, :] * status[:, :, :, None]
    diff = x[:, :, None, :, :] - x[:, :, :, None, :]
    dist = jnp.sqrt(jnp.sum(diff * diff, axis=-1))
    kmat = jnp.exp(-(dist * joint) / (2.0 * sigma ** 2))
    matches_loss = 1.0 - jnp.min(kmat, axis=(-1, -2))
    return matches_loss_weight * jnp.max(matches_loss)


if __name__ == "__main__":
    # Deterministic "config" (MaxMatchLoss.__init__ has no learnable params).
    config = {"sigma_for_mcl_soft": 0.5, "matches_loss_weight": 1.0}

    # Small shapes consistent with the forward: x (N, NM, M, E), status (N, NM, M).
    N, NM, M, E = 2, 4, 8, 32
    key = jax.random.PRNGKey(0)
    kx, ks = jax.random.split(key)
    x = jax.random.normal(kx, (N, NM, M, E), dtype=jnp.float32)
    status = jax.random.bernoulli(ks, 0.7, (N, NM, M)).astype(jnp.float32)

    loss = max_match_loss(
        x,
        status,
        sigma=config["sigma_for_mcl_soft"],
        matches_loss_weight=config["matches_loss_weight"],
    )
    loss = jax.block_until_ready(loss)

    ref = _reference_loss(
        x,
        status,
        sigma=config["sigma_for_mcl_soft"],
        matches_loss_weight=config["matches_loss_weight"],
    )
    assert jnp.allclose(loss, ref, atol=1e-5, rtol=1e-5), (loss, ref)

    print("KERNEL_OK")
</pallas_src>

<mosaic_0001>
module attributes {stable_mosaic.version = 11 : i64} {
  func.func @kernel(%arg0: i32, %arg1: memref<128x128xf32, #tpu.memory_space<vmem>>, %arg2: memref<1x128x32xf32, #tpu.memory_space<vmem>>, %arg3: memref<1x128xf32, #tpu.memory_space<vmem>>, %arg4: memref<1x1x1xf32, #tpu.memory_space<vmem>>) attributes {dimension_semantics = [#tpu.dimension_semantics<parallel>], iteration_bounds = array<i64: 1>, scalar_prefetch = 0 : i64, scratch_operands = 0 : i64, tpu.core_type = #tpu.core_type<tc>, window_params = [{pipeline_mode = #tpu.pipeline_mode<synchronous>, transform_indices = @transform_0, window_bounds = array<i64: 128, 128>}, {transform_indices = @transform_1, window_bounds = array<i64: 1, 128, 32>}, {transform_indices = @transform_2, window_bounds = array<i64: 1, 128>}, {transform_indices = @transform_3, window_bounds = array<i64: 1, 1, 1>}]} {
    %c0 = arith.constant 0 : index
    %c0_0 = arith.constant 0 : index
    %0 = vector.load %arg1[%c0, %c0_0] : memref<128x128xf32, #tpu.memory_space<vmem>>, vector<128x128xf32>
    %cst = arith.constant 0.000000e+00 : f32
    %1 = vector.broadcast %cst : f32 to vector<1x1xf32>
    %c0_i32 = arith.constant 0 : i32
    %c1_i32 = arith.constant 1 : i32
    %2 = arith.muli %c0_i32, %c1_i32 : i32
    %3 = tpu.assume_multiple %2, 1 : i32
    %4 = arith.index_cast %3 : i32 to index
    %c0_1 = arith.constant 0 : index
    %c0_2 = arith.constant 0 : index
    %5 = vector.load %arg2[%4, %c0_1, %c0_2] : memref<1x128x32xf32, #tpu.memory_space<vmem>>, vector<1x128x32xf32>
    %6 = arith.index_cast %3 : i32 to index
    %c0_3 = arith.constant 0 : index
    %7 = vector.load %arg3[%6, %c0_3] : memref<1x128xf32, #tpu.memory_space<vmem>>, vector<1x128xf32>
    %8 = arith.mulf %5, %5 : vector<1x128x32xf32>
    %cst_4 = arith.constant dense<0.000000e+00> : vector<1x128xf32>
    %9 = vector.multi_reduction <add>, %8, %cst_4 [2] : vector<1x128x32xf32> to vector<1x128xf32>
    %10 = vector.shape_cast %9 : vector<1x128xf32> to vector<1x128x1xf32>
    %11 = tpu.transpose %10, [0, 2, 1] : vector<1x128x1xf32> -> vector<1x1x128xf32>
    "tpu.trace_start"() <{level = 10 : i32, message = "pme,pne->pmn"}> : () -> ()
    %cst_5 = arith.constant dense<0.000000e+00> : vector<1x128x128xf32>
    %12 = tpu.matmul %5, %5, %cst_5 {dimension_numbers = #tpu.dot_dimension_numbers<[2], [2], [1], [1], [0, 0, 0, 1, 1, 1], [0], [0]>} : vector<1x128x32xf32>, vector<1x128x32xf32>, vector<1x128x128xf32> -> vector<1x128x128xf32>
    "tpu.trace_stop"() : () -> ()
    %13 = vector.broadcast %10 : vector<1x128x1xf32> to vector<1x128x128xf32>
    %14 = vector.broadcast %11 : vector<1x1x128xf32> to vector<1x128x128xf32>
    %15 = arith.addf %13, %14 : vector<1x128x128xf32>
    %cst_6 = arith.constant 2.000000e+00 : f32
    %16 = vector.broadcast %cst_6 : f32 to vector<1x128x128xf32>
    %17 = arith.mulf %16, %12 : vector<1x128x128xf32>
    %18 = arith.subf %15, %17 : vector<1x128x128xf32>
    %cst_7 = arith.constant 0.000000e+00 : f32
    %19 = vector.broadcast %cst_7 : f32 to vector<1x128x128xf32>
    %20 = arith.maximumf %18, %19 : vector<1x128x128xf32>
    %21 = vector.shape_cast %7 : vector<1x128xf32> to vector<1x1x128xf32>
    %22 = tpu.transpose %21, [0, 2, 1] : vector<1x1x128xf32> -> vector<1x128x1xf32>
    %23 = vector.broadcast %22 : vector<1x128x1xf32> to vector<1x128x128xf32>
    %24 = vector.broadcast %21 : vector<1x1x128xf32> to vector<1x128x128xf32>
    %25 = arith.mulf %23, %24 : vector<1x128x128xf32>
    %cst_8 = arith.constant 0.000000e+00 : f32
    %26 = vector.broadcast %cst_8 : f32 to vector<1x128x128xf32>
    %27 = arith.maximumf %25, %26 : vector<1x128x128xf32>
    %28 = vector.shape_cast %0 : vector<128x128xf32> to vector<1x128x128xf32>
    %29 = arith.mulf %27, %28 : vector<1x128x128xf32>
    %30 = arith.mulf %29, %29 : vector<1x128x128xf32>
    %31 = arith.mulf %20, %30 : vector<1x128x128xf32>
    %32 = vector.shape_cast %31 : vector<1x128x128xf32> to vector<1x1x128x128xf32>
    %cst_9 = arith.constant dense<0xFF800000> : vector<1xf32>
    %33 = vector.multi_reduction <maximumf>, %32, %cst_9 [1, 2, 3] : vector<1x1x128x128xf32> to vector<1xf32>
    %34 = vector.shape_cast %33 : vector<1xf32> to vector<1x1x1x1xf32>
    %35 = vector.extract %34[0, 0, 0, 0] : f32 from vector<1x1x1x1xf32>
    %36 = vector.broadcast %35 : f32 to vector<1x1xf32>
    %37 = arith.maximumf %1, %36 : vector<1x1xf32>
    %c1_i32_10 = arith.constant 1 : i32
    %38 = vector.shape_cast %37 : vector<1x1xf32> to vector<1x1x1xf32>
    %cst_11 = arith.constant dense<0xFF800000> : vector<1xf32>
    %39 = vector.multi_reduction <maximumf>, %38, %cst_11 [1, 2] : vector<1x1x1xf32> to vector<1xf32>
    %40 = vector.shape_cast %39 : vector<1xf32> to vector<1x1x1xf32>
    %41 = vector.extract %40[0, 0, 0] : f32 from vector<1x1x1xf32>
    %42 = vector.broadcast %41 : f32 to vector<1x1x1xf32>
    %c0_12 = arith.constant 0 : index
    %c0_13 = arith.constant 0 : index
    %c0_14 = arith.constant 0 : index
    %43 = vector.load %arg4[%c0_12, %c0_13, %c0_14] : memref<1x1x1xf32, #tpu.memory_space<vmem>>, vector<1x1x1xf32>
    tpu.vector_store %arg4[%c0_12, %c0_13, %c0_14], %42 {strides = array<i32>} : memref<1x1x1xf32, #tpu.memory_space<vmem>>, vector<1x1x1xf32>,
    return
  }
  func.func @transform_0(%arg0: i32) -> (i32, i32) {
    %c0_i32 = arith.constant 0 : i32
    %c0_i32_0 = arith.constant 0 : i32
    %c0_i32_1 = arith.constant 0 : i32
    return %c0_i32, %c0_i32_0 : i32, i32
  }
  func.func @transform_1(%arg0: i32) -> (i32, i32, i32) {
    %c0_i32 = arith.constant 0 : i32
    %c0_i32_0 = arith.constant 0 : i32
    %c0_i32_1 = arith.constant 0 : i32
    return %arg0, %c0_i32, %c0_i32_0 : i32, i32, i32
  }
  func.func @transform_2(%arg0: i32) -> (i32, i32) {
    %c0_i32 = arith.constant 0 : i32
    %c0_i32_0 = arith.constant 0 : i32
    return %arg0, %c0_i32 : i32, i32
  }
  func.func @transform_3(%arg0: i32) -> (i32, i32, i32) {
    %c0_i32 = arith.constant 0 : i32
    %c0_i32_0 = arith.constant 0 : i32
    %c0_i32_1 = arith.constant 0 : i32
    return %arg0, %c0_i32, %c0_i32_0 : i32, i32, i32
  }
}

</mosaic_0001>

<llo_original>
// kernel: tpu_custom_call.1
$region0: #{tpu_custom_call.1}
  #allocation0 [shape = 'u32[]', space=smem, size = 0x4, offset = 0x4, fixed_abs, tag = 'smem constant byte address 0x4 - core index']
  #allocation1 [shape = 'u32[144,128]{1,0:T(1,128)}', space=vmem, size = 0x12000, scoped, tag = 'internal scratch']
  %s0 = inlined_call_operand.vmem [shape: f32[128,128], index: 0, kind: input, shape index: {}]
  %s1 = inlined_call_operand.vmem [shape: f32[1,128,32], index: 1, kind: input, shape index: {}]
  %s2 = inlined_call_operand.vmem [shape: f32[1,128], index: 2, kind: input, shape index: {}]
  %s3 = inlined_call_operand.hbm [shape: f32[1,1,1], index: 3, kind: output, shape index: {}]
  %s4 = sld [smem:[#allocation0]]
  $region22: #{tpu_custom_call.1} parent=0
    _
  %s6 = ssub.s32 1, %s4
  %s7 = scalar_select 0, %s6, %s4
  $region1: #{tpu_custom_call.1} parent=0
    #allocation2 [shape = 'u8[512]{0}', space=vmem, size = 0x400, scoped, tag = 'output window, operand 0, single buffered']
    #allocation3 [shape = 's32[1]{0}', space=sflag, size = 0x4, scoped, tag = 'scoped memory for tpu_custom_call.1']
    %8 = vsyncpa [#allocation3], 0
    // Predicated region
    $region2: #{tpu_custom_call.1} parent=1 // pred_check
      _
    $region3: #{tpu_custom_call.1} parent=1 // pred_check_branch
      %10 = sbr.rel (0) target = $region5
    $region4: #{tpu_custom_call.1} parent=1 // pred_region
      _
    $region5: #{tpu_custom_call.1} parent=1 // pred_fallthru
      _
    // Predicated region
    $region6: #{tpu_custom_call.1} parent=1 // pred_check
      _
    $region7: #{tpu_custom_call.1} parent=1 // pred_check_branch
      %12 = sbr.rel (0) target = $region9
    $region8: #{tpu_custom_call.1} parent=1 // pred_region
      _
    $region9: #{tpu_custom_call.1} parent=1 // pred_fallthru
      _
    // Predicated region
    $region10: #{tpu_custom_call.1} parent=1 // pred_check
      _
    $region11: #{tpu_custom_call.1} parent=1 // pred_check_branch
      %14 = sbr.rel (0) target = $region13
    $region12: #{tpu_custom_call.1} parent=1 // pred_region
      _
    $region13: #{tpu_custom_call.1} parent=1 // pred_fallthru
      _
    %v15 = vld [vmem:[%s0] sm:$0xff]
    %v16 = vld [vmem:[%s0 + $0x8] sm:$0xff]
    %v17 = vld [vmem:[%s0 + $0x10] sm:$0xff]
    %v18 = vld [vmem:[%s0 + $0x18] sm:$0xff]
    %v19 = vld [vmem:[%s0 + $0x20] sm:$0xff]
    %v20 = vld [vmem:[%s0 + $0x28] sm:$0xff]
    %v21 = vld [vmem:[%s0 + $0x30] sm:$0xff]
    %v22 = vld [vmem:[%s0 + $0x38] sm:$0xff]
    %v23 = vld [vmem:[%s0 + $0x40] sm:$0xff]
    %v24 = vld [vmem:[%s0 + $0x48] sm:$0xff]
    %v25 = vld [vmem:[%s0 + $0x50] sm:$0xff]
    %v26 = vld [vmem:[%s0 + $0x58] sm:$0xff]
    %v27 = vld [vmem:[%s0 + $0x60] sm:$0xff]
    %v28 = vld [vmem:[%s0 + $0x68] sm:$0xff]
    %v29 = vld [vmem:[%s0 + $0x70] sm:$0xff]
    %v30 = vld [vmem:[%s0 + $0x78] sm:$0xff]
    %s31 = smul.u32 0, 128
    %s32 = scalar_lea.vmem %s1, %s31
    %v33 = vld [vmem:[%s32] sm:$0xff]
    %v34 = vld [vmem:[%s32 + $0x8] sm:$0xff]
    %v35 = vld [vmem:[%s32 + $0x10] sm:$0xff]
    %v36 = vld [vmem:[%s32 + $0x18] sm:$0xff]
    %v37 = vld [vmem:[%s32 + $0x20] sm:$0xff]
    %v38 = vld [vmem:[%s32 + $0x28] sm:$0xff]
    %v39 = vld [vmem:[%s32 + $0x30] sm:$0xff]
    %v40 = vld [vmem:[%s32 + $0x38] sm:$0xff]
    %v41 = vld [vmem:[%s32 + $0x40] sm:$0xff]
    %v42 = vld [vmem:[%s32 + $0x48] sm:$0xff]
    %v43 = vld [vmem:[%s32 + $0x50] sm:$0xff]
    %v44 = vld [vmem:[%s32 + $0x58] sm:$0xff]
    %v45 = vld [vmem:[%s32 + $0x60] sm:$0xff]
    %v46 = vld [vmem:[%s32 + $0x68] sm:$0xff]
    %v47 = vld [vmem:[%s32 + $0x70] sm:$0xff]
    %v48 = vld [vmem:[%s32 + $0x78] sm:$0xff]
    %v49 = vld [vmem:[%s2] sm:$0x1]
    %v50 = vmul.f32 %v33, %v33
    %v51 = vmul.f32 %v34, %v34
    %v52 = vmul.f32 %v35, %v35
    %v53 = vmul.f32 %v36, %v36
    %v54 = vmul.f32 %v37, %v37
    %v55 = vmul.f32 %v38, %v38
    %v56 = vmul.f32 %v39, %v39
    %v57 = vmul.f32 %v40, %v40
    %v58 = vmul.f32 %v41, %v41
    %v59 = vmul.f32 %v42, %v42
    %v60 = vmul.f32 %v43, %v43
    %v61 = vmul.f32 %v44, %v44
    %v62 = vmul.f32 %v45, %v45
    %v63 = vmul.f32 %v46, %v46
    %v64 = vmul.f32 %v47, %v47
    %v65 = vmul.f32 %v48, %v48
    %vm66 = vcmask 261120
    %v67 = vsel %vm66, %v50, 0.0
    %68 = vadd.xlane.f32.xlu0 %v67
    %v69 = vpop.xlane.xlu0 %68
    %v70 = vsel %vm66, %v51, 0.0
    %71 = vadd.xlane.f32.xlu0 %v70
    %v72 = vpop.xlane.xlu0 %71
    %v73 = vsel %vm66, %v52, 0.0
    %74 = vadd.xlane.f32.xlu0 %v73
    %v75 = vpop.xlane.xlu0 %74
    %v76 = vsel %vm66, %v53, 0.0
    %77 = vadd.xlane.f32.xlu0 %v76
    %v78 = vpop.xlane.xlu0 %77
    %v79 = vsel %vm66, %v54, 0.0
    %80 = vadd.xlane.f32.xlu0 %v79
    %v81 = vpop.xlane.xlu0 %80
    %v82 = vsel %vm66, %v55, 0.0
    %83 = vadd.xlane.f32.xlu0 %v82
    %v84 = vpop.xlane.xlu0 %83
    %v85 = vsel %vm66, %v56, 0.0
    %86 = vadd.xlane.f32.xlu0 %v85
    %v87 = vpop.xlane.xlu0 %86
    %v88 = vsel %vm66, %v57, 0.0
    %89 = vadd.xlane.f32.xlu0 %v88
    %v90 = vpop.xlane.xlu0 %89
    %v91 = vsel %vm66, %v58, 0.0
    %92 = vadd.xlane.f32.xlu0 %v91
    %v93 = vpop.xlane.xlu0 %92
    %v94 = vsel %vm66, %v59, 0.0
    %95 = vadd.xlane.f32.xlu0 %v94
    %v96 = vpop.xlane.xlu0 %95
    %v97 = vsel %vm66, %v60, 0.0
    %98 = vadd.xlane.f32.xlu0 %v97
    %v99 = vpop.xlane.xlu0 %98
    %v100 = vsel %vm66, %v61, 0.0
    %101 = vadd.xlane.f32.xlu0 %v100
    %v102 = vpop.xlane.xlu0 %101
    %v103 = vsel %vm66, %v62, 0.0
    %104 = vadd.xlane.f32.xlu0 %v103
    %v105 = vpop.xlane.xlu0 %104
    %v106 = vsel %vm66, %v63, 0.0
    %107 = vadd.xlane.f32.xlu0 %v106
    %v108 = vpop.xlane.xlu0 %107
    %v109 = vsel %vm66, %v64, 0.0
    %110 = vadd.xlane.f32.xlu0 %v109
    %v111 = vpop.xlane.xlu0 %110
    %v112 = vsel %vm66, %v65, 0.0
    %113 = vadd.xlane.f32.xlu0 %v112
    %v114 = vpop.xlane.xlu0 %113
    %115 = vxpose.xlu0.b32.start [1/16] %v69, 128
    %116 = vxpose.xlu0.b32.cont [2/16] %v72, 128
    %117 = vxpose.xlu0.b32.cont [3/16] %v75, 128
    %118 = vxpose.xlu0.b32.cont [4/16] %v78, 128
    %119 = vxpose.xlu0.b32.cont [5/16] %v81, 128
    %120 = vxpose.xlu0.b32.cont [6/16] %v84, 128
    %121 = vxpose.xlu0.b32.cont [7/16] %v87, 128
    %122 = vxpose.xlu0.b32.cont [8/16] %v90, 128
    %123 = vxpose.xlu0.b32.cont [9/16] %v93, 128
    %124 = vxpose.xlu0.b32.cont [10/16] %v96, 128
    %125 = vxpose.xlu0.b32.cont [11/16] %v99, 128
    %126 = vxpose.xlu0.b32.cont [12/16] %v102, 128
    %127 = vxpose.xlu0.b32.cont [13/16] %v105, 128
    %128 = vxpose.xlu0.b32.cont [14/16] %v108, 128
    %129 = vxpose.xlu0.b32.cont [15/16] %v111, 128
    %130 = vxpose.xlu0.b32.end [16/16] %v114, 128
    %v131 = vpop.trf.xlu0
    %v132 = vpop.trf.xlu0
    %v133 = vpop.trf.xlu0
    %v134 = vpop.trf.xlu0
    %v135 = vpop.trf.xlu0
    %v136 = vpop.trf.xlu0
    %v137 = vpop.trf.xlu0
    %v138 = vpop.trf.xlu0
    %v139 = vpop.trf.xlu0
    %v140 = vpop.trf.xlu0
    %v141 = vpop.trf.xlu0
    %v142 = vpop.trf.xlu0
    %v143 = vpop.trf.xlu0
    %v144 = vpop.trf.xlu0
    %v145 = vpop.trf.xlu0
    %v146 = vpop.trf.xlu0
    %v148 = vsel %vm66, %v33, 0
    %v151 = vsel %vm66, %v34, 0
    %v154 = vsel %vm66, %v35, 0
    %v157 = vsel %vm66, %v36, 0
    %v160 = vsel %vm66, %v37, 0
    %v163 = vsel %vm66, %v38, 0
    %v166 = vsel %vm66, %v39, 0
    %v169 = vsel %vm66, %v40, 0
    %v172 = vsel %vm66, %v41, 0
    %v175 = vsel %vm66, %v42, 0
    %v178 = vsel %vm66, %v43, 0
    %v181 = vsel %vm66, %v44, 0
    %v184 = vsel %vm66, %v45, 0
    %v187 = vsel %vm66, %v46, 0
    %v190 = vsel %vm66, %v47, 0
    %v193 = vsel %vm66, %v48, 0
    %195 = vmatprep.subr.mxu0 0.0
    %196 = vmatpush1.xpose.msra.mxu0 %v193
    %197 = vmatprep.subr.mxu0 0.0
    %198 = vmatpush1.xpose.msra.mxu0 %v190
    %199 = vmatprep.subr.mxu0 0.0
    %200 = vmatpush1.xpose.msra.mxu0 %v187
    %201 = vmatprep.subr.mxu0 0.0
    %202 = vmatpush1.xpose.msra.mxu0 %v184
    %203 = vmatprep.subr.mxu0 0.0
    %204 = vmatpush1.xpose.msra.mxu0 %v181
    %205 = vmatprep.subr.mxu0 0.0
    %206 = vmatpush1.xpose.msra.mxu0 %v178
    %207 = vmatprep.subr.mxu0 0.0
    %208 = vmatpush1.xpose.msra.mxu0 %v175
    %209 = vmatprep.subr.mxu0 0.0
    %210 = vmatpush1.xpose.msra.mxu0 %v172
    %211 = vmatprep.subr.mxu0 0.0
    %212 = vmatpush1.xpose.msra.mxu0 %v169
    %213 = vmatprep.subr.mxu0 0.0
    %214 = vmatpush1.xpose.msra.mxu0 %v166
    %215 = vmatprep.subr.mxu0 0.0
    %216 = vmatpush1.xpose.msra.mxu0 %v163
    %217 = vmatprep.subr.mxu0 0.0
    %218 = vmatpush1.xpose.msra.mxu0 %v160
    %219 = vmatprep.subr.mxu0 0.0
    %220 = vmatpush1.xpose.msra.mxu0 %v157
    %221 = vmatprep.subr.mxu0 0.0
    %222 = vmatpush1.xpose.msra.mxu0 %v154
    %223 = vmatprep.subr.mxu0 0.0
    %224 = vmatpush1.xpose.msra.mxu0 %v151
    %225 = vmatprep.subr.mxu0 0.0
    %226 = vmatpush1.xpose.msra.mxu0 %v148
    %227 = vmatprep.subr.mxu0 0.0
    %228 = vmatpush2.xpose.msra.mxu0 0.0
    %229 = vmatprep.subr.mxu0 0.0
    %230 = vmatpush2.xpose.msra.mxu0 0.0
    %231 = vmatprep.subr.mxu0 0.0
    %232 = vmatpush2.xpose.msra.mxu0 0.0
    %233 = vmatprep.subr.mxu0 0.0
    %234 = vmatpush2.xpose.msra.mxu0 0.0
    %235 = vmatprep.subr.mxu0 0.0
    %236 = vmatpush2.xpose.msra.mxu0 0.0
    %237 = vmatprep.subr.mxu0 0.0
    %238 = vmatpush2.xpose.msra.mxu0 0.0
    %239 = vmatprep.subr.mxu0 0.0
    %240 = vmatpush2.xpose.msra.mxu0 0.0
    %241 = vmatprep.subr.mxu0 0.0
    %242 = vmatpush2.xpose.msra.mxu0 0.0
    %243 = vmatprep.subr.mxu0 0.0
    %244 = vmatpush2.xpose.msra.mxu0 0.0
    %245 = vmatprep.subr.mxu0 0.0
    %246 = vmatpush2.xpose.msra.mxu0 0.0
    %247 = vmatprep.subr.mxu0 0.0
    %248 = vmatpush2.xpose.msra.mxu0 0.0
    %249 = vmatprep.subr.mxu0 0.0
    %250 = vmatpush2.xpose.msra.mxu0 0.0
    %251 = vmatprep.subr.mxu0 0.0
    %252 = vmatpush2.xpose.msra.mxu0 0.0
    %253 = vmatprep.subr.mxu0 0.0
    %254 = vmatpush2.xpose.msra.mxu0 0.0
    %255 = vmatprep.subr.mxu0 0.0
    %256 = vmatpush2.xpose.msra.mxu0 0.0
    %257 = vmatprep.subr.mxu0 0.0
    %258 = vmatpush2.xpose.msra.mxu0 0.0
    %259 = vmatprep.mubr.f32.mxu0 0.0
    %260 = vmatmul.mubr.f32.gmra.mxu0 %v148
    %v261 = vpop.f32.mrf.mxu0
    %v262 = vadd.f32 0.0, %v261
    %v263 = vpop.f32.mrf.mxu0
    %264 = vmatprep.mubr.f32.mxu0 0.0
    %265 = vmatmul.mubr.f32.gmra.mxu0 %v151
    %v266 = vpop.f32.mrf.mxu0
    %v267 = vadd.f32 0.0, %v266
    %v268 = vpop.f32.mrf.mxu0
    %269 = vmatprep.mubr.f32.mxu0 0.0
    %270 = vmatmul.mubr.f32.gmra.mxu0 %v154
    %v271 = vpop.f32.mrf.mxu0
    %v272 = vadd.f32 0.0, %v271
    %v273 = vpop.f32.mrf.mxu0
    %274 = vmatprep.mubr.f32.mxu0 0.0
    %275 = vmatmul.mubr.f32.gmra.mxu0 %v157
    %v276 = vpop.f32.mrf.mxu0
    %v277 = vadd.f32 0.0, %v276
    %v278 = vpop.f32.mrf.mxu0
    %279 = vmatprep.mubr.f32.mxu0 0.0
    %280 = vmatmul.mubr.f32.gmra.mxu0 %v160
    %v281 = vpop.f32.mrf.mxu0
    %v282 = vadd.f32 0.0, %v281
    %v283 = vpop.f32.mrf.mxu0
    %284 = vmatprep.mubr.f32.mxu0 0.0
    %285 = vmatmul.mubr.f32.gmra.mxu0 %v163
    %v286 = vpop.f32.mrf.mxu0
    %v287 = vadd.f32 0.0, %v286
    %v288 = vpop.f32.mrf.mxu0
    %289 = vmatprep.mubr.f32.mxu0 0.0
    %290 = vmatmul.mubr.f32.gmra.mxu0 %v166
    %v291 = vpop.f32.mrf.mxu0
    %v292 = vadd.f32 0.0, %v291
    %v293 = vpop.f32.mrf.mxu0
    %294 = vmatprep.mubr.f32.mxu0 0.0
    %295 = vmatmul.mubr.f32.gmra.mxu0 %v169
    %v296 = vpop.f32.mrf.mxu0
    %v297 = vadd.f32 0.0, %v296
    %v298 = vpop.f32.mrf.mxu0
    %299 = vmatprep.mubr.f32.mxu0 0.0
    %300 = vmatmul.mubr.f32.gmra.mxu0 %v172
    %v301 = vpop.f32.mrf.mxu0
    %v302 = vadd.f32 0.0, %v301
    %v303 = vpop.f32.mrf.mxu0
    %304 = vmatprep.mubr.f32.mxu0 0.0
    %305 = vmatmul.mubr.f32.gmra.mxu0 %v175
    %v306 = vpop.f32.mrf.mxu0
    %v307 = vadd.f32 0.0, %v306
    %v308 = vpop.f32.mrf.mxu0
    %309 = vmatprep.mubr.f32.mxu0 0.0
    %310 = vmatmul.mubr.f32.gmra.mxu0 %v178
    %v311 = vpop.f32.mrf.mxu0
    %v312 = vadd.f32 0.0, %v311
    %v313 = vpop.f32.mrf.mxu0
    %314 = vmatprep.mubr.f32.mxu0 0.0
    %315 = vmatmul.mubr.f32.gmra.mxu0 %v181
    %v316 = vpop.f32.mrf.mxu0
    %v317 = vadd.f32 0.0, %v316
    %v318 = vpop.f32.mrf.mxu0
    %319 = vmatprep.mubr.f32.mxu0 0.0
    %320 = vmatmul.mubr.f32.gmra.mxu0 %v184
    %v321 = vpop.f32.mrf.mxu0
    %v322 = vadd.f32 0.0, %v321
    %v323 = vpop.f32.mrf.mxu0
    %324 = vmatprep.mubr.f32.mxu0 0.0
    %325 = vmatmul.mubr.f32.gmra.mxu0 %v187
    %v326 = vpop.f32.mrf.mxu0
    %v327 = vadd.f32 0.0, %v326
    %v328 = vpop.f32.mrf.mxu0
    %329 = vmatprep.mubr.f32.mxu0 0.0
    %330 = vmatmul.mubr.f32.gmra.mxu0 %v190
    %v331 = vpop.f32.mrf.mxu0
    %v332 = vadd.f32 0.0, %v331
    %v333 = vpop.f32.mrf.mxu0
    %334 = vmatprep.mubr.f32.mxu0 0.0
    %335 = vmatmul.mubr.f32.gmra.mxu0 %v193
    %v336 = vpop.f32.mrf.mxu0
    %v337 = vadd.f32 0.0, %v336
    %v338 = vpop.f32.mrf.mxu0
    %339 = vdwg.mxu0
    %v340 = vlaneseq
    %v341 = vshrl.u32 %v340, 7
    %v342 = vsub.s32 0, %v341
    %v343 = vrot.slane %v131, %v342
    %v344 = vadd.f32 %v69, %v343
    %v345 = vadd.f32 %v72, %v343
    %v346 = vadd.f32 %v75, %v343
    %v347 = vadd.f32 %v78, %v343
    %v348 = vadd.f32 %v81, %v343
    %v349 = vadd.f32 %v84, %v343
    %v350 = vadd.f32 %v87, %v343
    %v351 = vadd.f32 %v90, %v343
    %v352 = vadd.f32 %v93, %v343
    %v353 = vadd.f32 %v96, %v343
    %v354 = vadd.f32 %v99, %v343
    %v355 = vadd.f32 %v102, %v343
    %v356 = vadd.f32 %v105, %v343
    %v357 = vadd.f32 %v108, %v343
    %v358 = vadd.f32 %v111, %v343
    %v359 = vadd.f32 %v114, %v343
    %v360 = vmul.f32 %v262, 2.0
    %v361 = vmul.f32 %v267, 2.0
    %v362 = vmul.f32 %v272, 2.0
    %v363 = vmul.f32 %v277, 2.0
    %v364 = vmul.f32 %v282, 2.0
    %v365 = vmul.f32 %v287, 2.0
    %v366 = vmul.f32 %v292, 2.0
    %v367 = vmul.f32 %v297, 2.0
    %v368 = vmul.f32 %v302, 2.0
    %v369 = vmul.f32 %v307, 2.0
    %v370 = vmul.f32 %v312, 2.0
    %v371 = vmul.f32 %v317, 2.0
    %v372 = vmul.f32 %v322, 2.0
    %v373 = vmul.f32 %v327, 2.0
    %v374 = vmul.f32 %v332, 2.0
    %v375 = vmul.f32 %v337, 2.0
    %v376 = vsub.f32 %v344, %v360
    %v377 = vsub.f32 %v345, %v361
    %v378 = vsub.f32 %v346, %v362
    %v379 = vsub.f32 %v347, %v363
    %v380 = vsub.f32 %v348, %v364
    %v381 = vsub.f32 %v349, %v365
    %v382 = vsub.f32 %v350, %v366
    %v383 = vsub.f32 %v351, %v367
    %v384 = vsub.f32 %v352, %v368
    %v385 = vsub.f32 %v353, %v369
    %v386 = vsub.f32 %v354, %v370
    %v387 = vsub.f32 %v355, %v371
    %v388 = vsub.f32 %v356, %v372
    %v389 = vsub.f32 %v357, %v373
    %v390 = vsub.f32 %v358, %v374
    %v391 = vsub.f32 %v359, %v375
    %v392 = vmax.f32 %v376, 0.0
    %v393 = vmax.f32 %v377, 0.0
    %v394 = vmax.f32 %v378, 0.0
    %v395 = vmax.f32 %v379, 0.0
    %v396 = vmax.f32 %v380, 0.0
    %v397 = vmax.f32 %v381, 0.0
    %v398 = vmax.f32 %v382, 0.0
    %v399 = vmax.f32 %v383, 0.0
    %v400 = vmax.f32 %v384, 0.0
    %v401 = vmax.f32 %v385, 0.0
    %v402 = vmax.f32 %v386, 0.0
    %v403 = vmax.f32 %v387, 0.0
    %v404 = vmax.f32 %v388, 0.0
    %v405 = vmax.f32 %v389, 0.0
    %v406 = vmax.f32 %v390, 0.0
    %v407 = vmax.f32 %v391, 0.0
    %408 = vxpose.xlu0.b32.start [1/16] %v49, 128
    %409 = vxpose.xlu0.b32.cont [2/16] 0.0, 128
    %410 = vxpose.xlu0.b32.cont [3/16] 0.0, 128
    %411 = vxpose.xlu0.b32.cont [4/16] 0.0, 128
    %412 = vxpose.xlu0.b32.cont [5/16] 0.0, 128
    %413 = vxpose.xlu0.b32.cont [6/16] 0.0, 128
    %414 = vxpose.xlu0.b32.cont [7/16] 0.0, 128
    %415 = vxpose.xlu0.b32.cont [8/16] 0.0, 128
    %416 = vxpose.xlu0.b32.cont [9/16] 0.0, 128
    %417 = vxpose.xlu0.b32.cont [10/16] 0.0, 128
    %418 = vxpose.xlu0.b32.cont [11/16] 0.0, 128
    %419 = vxpose.xlu0.b32.cont [12/16] 0.0, 128
    %420 = vxpose.xlu0.b32.cont [13/16] 0.0, 128
    %421 = vxpose.xlu0.b32.cont [14/16] 0.0, 128
    %422 = vxpose.xlu0.b32.cont [15/16] 0.0, 128
    %423 = vxpose.xlu0.b32.end [16/16] 0.0, 128
    %v424 = vpop.trf.xlu0
    %v425 = vpop.trf.xlu0
    %v426 = vpop.trf.xlu0
    %v427 = vpop.trf.xlu0
    %v428 = vpop.trf.xlu0
    %v429 = vpop.trf.xlu0
    %v430 = vpop.trf.xlu0
    %v431 = vpop.trf.xlu0
    %v432 = vpop.trf.xlu0
    %v433 = vpop.trf.xlu0
    %v434 = vpop.trf.xlu0
    %v435 = vpop.trf.xlu0
    %v436 = vpop.trf.xlu0
    %v437 = vpop.trf.xlu0
    %v438 = vpop.trf.xlu0
    %v439 = vpop.trf.xlu0
    %441 = vset.pattern.permute.xlu0 0
    %442 = vperm.xlu0 %441, %v424
    %v443 = vpop.permute.xlu0 %442
    %446 = vset.pattern.permute.xlu0 0
    %447 = vperm.xlu0 %446, %v425
    %v448 = vpop.permute.xlu0 %447
    %451 = vset.pattern.permute.xlu0 0
    %452 = vperm.xlu0 %451, %v426
    %v453 = vpop.permute.xlu0 %452
    %456 = vset.pattern.permute.xlu0 0
    %457 = vperm.xlu0 %456, %v427
    %v458 = vpop.permute.xlu0 %457
    %461 = vset.pattern.permute.xlu0 0
    %462 = vperm.xlu0 %461, %v428
    %v463 = vpop.permute.xlu0 %462
    %466 = vset.pattern.permute.xlu0 0
    %467 = vperm.xlu0 %466, %v429
    %v468 = vpop.permute.xlu0 %467
    %471 = vset.pattern.permute.xlu0 0
    %472 = vperm.xlu0 %471, %v430
    %v473 = vpop.permute.xlu0 %472
    %476 = vset.pattern.permute.xlu0 0
    %477 = vperm.xlu0 %476, %v431
    %v478 = vpop.permute.xlu0 %477
    %481 = vset.pattern.permute.xlu0 0
    %482 = vperm.xlu0 %481, %v432
    %v483 = vpop.permute.xlu0 %482
    %486 = vset.pattern.permute.xlu0 0
    %487 = vperm.xlu0 %486, %v433
    %v488 = vpop.permute.xlu0 %487
    %491 = vset.pattern.permute.xlu0 0
    %492 = vperm.xlu0 %491, %v434
    %v493 = vpop.permute.xlu0 %492
    %496 = vset.pattern.permute.xlu0 0
    %497 = vperm.xlu0 %496, %v435
    %v498 = vpop.permute.xlu0 %497
    %501 = vset.pattern.permute.xlu0 0
    %502 = vperm.xlu0 %501, %v436
    %v503 = vpop.permute.xlu0 %502
    %506 = vset.pattern.permute.xlu0 0
    %507 = vperm.xlu0 %506, %v437
    %v508 = vpop.permute.xlu0 %507
    %511 = vset.pattern.permute.xlu0 0
    %512 = vperm.xlu0 %511, %v438
    %v513 = vpop.permute.xlu0 %512
    %516 = vset.pattern.permute.xlu0 0
    %517 = vperm.xlu0 %516, %v439
    %v518 = vpop.permute.xlu0 %517
    %v521 = vlaneseq
    %v522 = vshrl.u32 %v521, 7
    %v523 = vsub.s32 0, %v522
    %v524 = vrot.slane %v49, %v523
    %v526 = vmul.f32 %v443, %v524
    %v527 = vmul.f32 %v448, %v524
    %v528 = vmul.f32 %v453, %v524
    %v529 = vmul.f32 %v458, %v524
    %v530 = vmul.f32 %v463, %v524
    %v531 = vmul.f32 %v468, %v524
    %v532 = vmul.f32 %v473, %v524
    %v533 = vmul.f32 %v478, %v524
    %v534 = vmul.f32 %v483, %v524
    %v535 = vmul.f32 %v488, %v524
    %v536 = vmul.f32 %v493, %v524
    %v537 = vmul.f32 %v498, %v524
    %v538 = vmul.f32 %v503, %v524
    %v539 = vmul.f32 %v508, %v524
    %v540 = vmul.f32 %v513, %v524
    %v541 = vmul.f32 %v518, %v524
    %v542 = vmax.f32 %v526, 0.0
    %v543 = vmax.f32 %v527, 0.0
    %v544 = vmax.f32 %v528, 0.0
    %v545 = vmax.f32 %v529, 0.0
    %v546 = vmax.f32 %v530, 0.0
    %v547 = vmax.f32 %v531, 0.0
    %v548 = vmax.f32 %v532, 0.0
    %v549 = vmax.f32 %v533, 0.0
    %v550 = vmax.f32 %v534, 0.0
    %v551 = vmax.f32 %v535, 0.0
    %v552 = vmax.f32 %v536, 0.0
    %v553 = vmax.f32 %v537, 0.0
    %v554 = vmax.f32 %v538, 0.0
    %v555 = vmax.f32 %v539, 0.0
    %v556 = vmax.f32 %v540, 0.0
    %v557 = vmax.f32 %v541, 0.0
    %v558 = vmul.f32 %v542, %v15
    %v559 = vmul.f32 %v543, %v16
    %v560 = vmul.f32 %v544, %v17
    %v561 = vmul.f32 %v545, %v18
    %v562 = vmul.f32 %v546, %v19
    %v563 = vmul.f32 %v547, %v20
    %v564 = vmul.f32 %v548, %v21
    %v565 = vmul.f32 %v549, %v22
    %v566 = vmul.f32 %v550, %v23
    %v567 = vmul.f32 %v551, %v24
    %v568 = vmul.f32 %v552, %v25
    %v569 = vmul.f32 %v553, %v26
    %v570 = vmul.f32 %v554, %v27
    %v571 = vmul.f32 %v555, %v28
    %v572 = vmul.f32 %v556, %v29
    %v573 = vmul.f32 %v557, %v30
    %v574 = vmul.f32 %v558, %v558
    %v575 = vmul.f32 %v559, %v559
    %v576 = vmul.f32 %v560, %v560
    %v577 = vmul.f32 %v561, %v561
    %v578 = vmul.f32 %v562, %v562
    %v579 = vmul.f32 %v563, %v563
    %v580 = vmul.f32 %v564, %v564
    %v581 = vmul.f32 %v565, %v565
    %v582 = vmul.f32 %v566, %v566
    %v583 = vmul.f32 %v567, %v567
    %v584 = vmul.f32 %v568, %v568
    %v585 = vmul.f32 %v569, %v569
    %v586 = vmul.f32 %v570, %v570
    %v587 = vmul.f32 %v571, %v571
    %v588 = vmul.f32 %v572, %v572
    %v589 = vmul.f32 %v573, %v573
    %v590 = vmul.f32 %v392, %v574
    %v591 = vmul.f32 %v393, %v575
    %v592 = vmul.f32 %v394, %v576
    %v593 = vmul.f32 %v395, %v577
    %v594 = vmul.f32 %v396, %v578
    %v595 = vmul.f32 %v397, %v579
    %v596 = vmul.f32 %v398, %v580
    %v597 = vmul.f32 %v399, %v581
    %v598 = vmul.f32 %v400, %v582
    %v599 = vmul.f32 %v401, %v583
    %v600 = vmul.f32 %v402, %v584
    %v601 = vmul.f32 %v403, %v585
    %v602 = vmul.f32 %v404, %v586
    %v603 = vmul.f32 %v405, %v587
    %v604 = vmul.f32 %v406, %v588
    %v605 = vmul.f32 %v407, %v589
    %v606 = vmax.f32 %v590, %v594
    %v607 = vmax.f32 %v591, %v595
    %v608 = vmax.f32 %v592, %v596
    %v609 = vmax.f32 %v593, %v597
    %v610 = vmax.f32 %v606, %v598
    %v611 = vmax.f32 %v607, %v599
    %v612 = vmax.f32 %v608, %v600
    %v613 = vmax.f32 %v609, %v601
    %v614 = vmax.f32 %v610, %v602
    %v615 = vmax.f32 %v611, %v603
    %v616 = vmax.f32 %v612, %v604
    %v617 = vmax.f32 %v613, %v605
    %v618 = vmax.f32 %v614, %v615
    %v619 = vmax.f32 %v616, %v617
    %v620 = vmax.f32 %v618, %v619
    %621 = vmax.xlane.f32.xlu0 %v620
    %v622 = vpop.xlane.xlu0 %621
    %v623 = vrot.slane %v622, 4
    %v624 = vmax.f32 %v622, %v623
    %v625 = vrot.slane %v624, 2
    %v626 = vmax.f32 %v624, %v625
    %v627 = vrot.slane %v626, 1
    %v628 = vmax.f32 %v626, %v627
    %s629 = vtos %v628
    %v630 = vstv %s629
    %v631 = vmax.f32 %v630, 0.0
    %s632 = vtos %v631
    %v633 = vstv %s632
    %vm634 = vcmask 0
    %635 = vst.msk [vmem:[#allocation2] sm:$0x1] %vm634, %v633
    // Predicated region
    $region14: #{tpu_custom_call.1} parent=1 // pred_check
      _
    $region15: #{tpu_custom_call.1} parent=1 // pred_check_branch
      %637 = sbr.rel (0) target = $region17
    $region16: #{tpu_custom_call.1} parent=1 // pred_region
      %s639 = ssub.s32 16, 16
      %640 = vsyncadd [#allocation3], %s639
      %s642 = sshll.u32 [#allocation2], 4
      %s643 = int_to_ptr.vmem [resolvable:$true] %s642
      %645 = dma.vmem_to_hbm [thread:$0]  %s643, 16, %s3, [#allocation3]
    $region17: #{tpu_custom_call.1} parent=1 // pred_fallthru
      _
    // Predicated region
    $region18: #{tpu_custom_call.1} parent=1 // pred_check
      _
    $region19: #{tpu_custom_call.1} parent=1 // pred_check_branch
      %647 = sbr.rel (0) target = $region21
    $region20: #{tpu_custom_call.1} parent=1 // pred_region
      %648 = dma.done [#allocation3], 16
    $region21: #{tpu_custom_call.1} parent=1 // pred_fallthru
      _
    %649 = vsyncpa [#allocation3], 1

</llo_original>
